<compile_context>
chip_gen: v5e
topology: v5e:2x2
jax: 0.10.0
libtpu: 0.0.40
codegen_flags: <defaults>
</compile_context>

<pallas_src>
import jax
import jax.numpy as jnp
from jax.experimental import pallas as pl
from jax.experimental.pallas import tpu as pltpu


LANES = 128                      # vreg lane width (fast axis)
SUBLANES = 8                     # sublane granularity for f32
TARGET_BLOCK_BYTES = 4 << 20     # ~4 MiB per pipelined buffer
SMALL_N = 1 << 16                # below this, fused XLA elementwise wins


def _round_up(v, m):
    return -(-v // m) * m


def _linear_kernel(wb_ref, x_ref, o_ref):
    # wb_ref is a (2,) f32 array in SMEM: [w, b].  One VPU FMA over the
    # lane-dense tile; no MXU (K == 1 would waste the systolic array).
    w = wb_ref[0]
    b = wb_ref[1]
    o_ref[...] = (x_ref[...].astype(jnp.float32) * w + b).astype(o_ref.dtype)


def _pick_width(n):
    """Largest lane-dense row width that divides N (no padding needed)."""
    for w in (2048, 1024, 512, 256, 128):
        if n % w == 0:
            return w, False
    return LANES, True           # not a multiple of 128 -> pad the tail


def simple_linear_regression(x, weight, bias, *, use_pallas=None):
    """y = x @ weight.T + bias with weight (1,1), bias (1).  x: (N, 1)."""
    n = x.shape[0]
    dtype = x.dtype
    w = weight.reshape(()).astype(jnp.float32)
    b = bias.reshape(()).astype(jnp.float32)

    if use_pallas is None:
        use_pallas = n >= SMALL_N
    if n == 0 or not use_pallas:
        # Small-N fast path: one fused pass, zero launch / layout overhead.
        return (x.astype(jnp.float32) * w + b).astype(dtype).reshape(n, 1)

    # ---- layout plumbing: (N, 1) -> lane-dense (rows, W), no pad if aligned
    x_flat = x.reshape(-1)                       # (N,1) -> (N,) is free
    width, needs_pad = _pick_width(n)
    if needs_pad:
        n_pad = _round_up(n, width)
        x_flat = jnp.pad(x_flat, (0, n_pad - n))  # only when N % 128 != 0
    else:
        n_pad = n
    rows = n_pad // width
    x_slab = x_flat.reshape(rows, width)

    # ---- block sizing: ~4 MiB buffers, grid >= 2 when possible ------------
    itemsize = jnp.dtype(dtype).itemsize
    target_rows = max(SUBLANES, TARGET_BLOCK_BYTES // (width * itemsize))
    if rows > target_rows:
        block_rows = (target_rows // SUBLANES) * SUBLANES
    elif rows >= 2 * SUBLANES:
        # Split into >= 2 steps so both v7x TensorCores get work.
        block_rows = _round_up(_round_up(rows, 2) // 2, SUBLANES)
    else:
        block_rows = rows                         # block == full dim (legal)
    grid = (pl.cdiv(rows, block_rows),)           # Pallas masks a ragged tail

    wb = jnp.stack([w, b])                        # (2,) f32, lives in SMEM

    y_slab = pl.pallas_call(
        _linear_kernel,
        out_shape=jax.ShapeDtypeStruct((rows, width), dtype),
        grid=grid,
        in_specs=[
            pl.BlockSpec(memory_space=pltpu.MemorySpace.SMEM),
            pl.BlockSpec((block_rows, width), lambda i: (i, 0)),
        ],
        out_specs=pl.BlockSpec((block_rows, width), lambda i: (i, 0)),
        compiler_params=pltpu.CompilerParams(
            dimension_semantics=("parallel",),
            vmem_limit_bytes=32 * 1024 * 1024,   # explicit for v5e's 16 MiB default
        ),
    )(wb, x_slab)

    # ---- undo the view: slab -> (N, 1)  (slice only if we padded) ---------
    y_flat = y_slab.reshape(-1)
    if needs_pad:
        y_flat = y_flat[:n]
    return y_flat.reshape(n, 1)


if __name__ == "__main__":
    # Deterministic parameters matching nn.Linear(1, 1) shapes.
    weight = jnp.array([[0.5]], dtype=jnp.float32)   # (out_features, in_features)
    bias = jnp.array([-0.25], dtype=jnp.float32)     # (out_features,)

    key = jax.random.PRNGKey(0)
    k1, k2, k3 = jax.random.split(key, 3)

    # 1) Tiny batch consistent with the module; force the Pallas path so the
    #    kernel itself is exercised.
    x_small = jax.random.normal(k1, (8, 1), dtype=jnp.float32)
    y_small = jax.block_until_ready(
        simple_linear_regression(x_small, weight, bias, use_pallas=True))
    ref_small = x_small @ weight.T + bias
    assert y_small.shape == (8, 1)
    assert jnp.allclose(y_small, ref_small, atol=1e-6)

    # 2) Same tiny batch through the auto small-N fast path.
    y_fast = jax.block_until_ready(simple_linear_regression(x_small, weight, bias))
    assert jnp.allclose(y_fast, ref_small, atol=1e-6)

    # 3) 128-aligned batch: zero-pad-free slab path.
    x_aligned = jax.random.normal(k2, (640, 1), dtype=jnp.float32)
    y_aligned = jax.block_until_ready(
        simple_linear_regression(x_aligned, weight, bias, use_pallas=True))
    assert jnp.allclose(y_aligned, x_aligned @ weight.T + bias, atol=1e-6)

    # 4) Unaligned batch: padded-tail fallback + multi-step masked grid.
    x_ragged = jax.random.normal(k3, (2055, 1), dtype=jnp.float32)
    y_ragged = jax.block_until_ready(
        simple_linear_regression(x_ragged, weight, bias, use_pallas=True))
    assert y_ragged.shape == (2055, 1)
    assert jnp.allclose(y_ragged, x_ragged @ weight.T + bias, atol=1e-6)

    print("KERNEL_OK")
</pallas_src>

<mosaic_0001>
module attributes {stable_mosaic.version = 11 : i64} {
  func.func @_linear_kernel(%arg0: i32, %arg1: memref<2xf32, #tpu.memory_space<smem>>, %arg2: memref<1x128xf32, #tpu.memory_space<vmem>>, %arg3: memref<1x128xf32, #tpu.memory_space<vmem>>) attributes {dimension_semantics = [#tpu.dimension_semantics<parallel>], iteration_bounds = array<i64: 1>, scalar_prefetch = 0 : i64, scratch_operands = 0 : i64, tpu.core_type = #tpu.core_type<tc>, window_params = [{transform_indices = @transform_0, window_bounds = array<i64: 2>}, {transform_indices = @transform_1, window_bounds = array<i64: 1, 128>}, {transform_indices = @transform_2, window_bounds = array<i64: 1, 128>}]} {
    %c0 = arith.constant 0 : index
    %0 = memref.load %arg1[%c0] : memref<2xf32, #tpu.memory_space<smem>>
    %c1 = arith.constant 1 : index
    %1 = memref.load %arg1[%c1] : memref<2xf32, #tpu.memory_space<smem>>
    %c0_0 = arith.constant 0 : index
    %c0_1 = arith.constant 0 : index
    %2 = vector.load %arg2[%c0_0, %c0_1] : memref<1x128xf32, #tpu.memory_space<vmem>>, vector<1x128xf32>
    %3 = vector.broadcast %0 : f32 to vector<1x128xf32>
    %4 = arith.mulf %2, %3 : vector<1x128xf32>
    %5 = vector.broadcast %1 : f32 to vector<1x128xf32>
    %6 = arith.addf %4, %5 : vector<1x128xf32>
    %c0_2 = arith.constant 0 : index
    %c0_3 = arith.constant 0 : index
    %7 = vector.load %arg3[%c0_2, %c0_3] : memref<1x128xf32, #tpu.memory_space<vmem>>, vector<1x128xf32>
    tpu.vector_store %arg3[%c0_2, %c0_3], %6 {strides = array<i32>} : memref<1x128xf32, #tpu.memory_space<vmem>>, vector<1x128xf32>,
    return
  }
  func.func @transform_0(%arg0: i32) -> i32 {
    %c0_i32 = arith.constant 0 : i32
    %c0_i32_0 = arith.constant 0 : i32
    return %c0_i32 : i32
  }
  func.func @transform_1(%arg0: i32) -> (i32, i32) {
    %c0_i32 = arith.constant 0 : i32
    %c0_i32_0 = arith.constant 0 : i32
    return %arg0, %c0_i32 : i32, i32
  }
  func.func @transform_2(%arg0: i32) -> (i32, i32) {
    %c0_i32 = arith.constant 0 : i32
    %c0_i32_0 = arith.constant 0 : i32
    return %arg0, %c0_i32 : i32, i32
  }
}

</mosaic_0001>

<llo_original>
// kernel: tpu_custom_call.1
$region0: #{tpu_custom_call.1}
  #allocation0 [shape = 'u32[]', space=smem, size = 0x4, offset = 0x4, fixed_abs, tag = 'smem constant byte address 0x4 - core index']
  #allocation1 [shape = 'u32[72,128]{1,0:T(1,128)}', space=vmem, size = 0x9000, scoped, tag = 'internal scratch']
  %s0 = inlined_call_operand.hbm [shape: f32[2], index: 0, kind: input, shape index: {}]
  %s1 = inlined_call_operand.hbm [shape: f32[1,128], index: 1, kind: input, shape index: {}]
  %s2 = inlined_call_operand.hbm [shape: f32[1,128], index: 2, kind: output, shape index: {}]
  %s3 = sld [smem:[#allocation0]]
  $region26: #{tpu_custom_call.1} parent=0
    _
  %s5 = ssub.s32 1, %s3
  %s6 = scalar_select 0, %s5, %s3
  $region1: #{tpu_custom_call.1} parent=0
    #allocation2 [shape = 'u8[512]{0}', space=smem, size = 0x200, scoped, tag = 'input window, operand 0, single buffered']
    #allocation3 [shape = 's32[1]{0}', space=sflag, size = 0x4, scoped, tag = 'scoped memory for tpu_custom_call.1']
    #allocation4 [shape = 's32[1]{0}', space=sflag, size = 0x4, scoped, tag = 'scoped memory for tpu_custom_call.1']
    #allocation5 [shape = 's32[1]{0}', space=sflag, size = 0x4, scoped, tag = 'scoped memory for tpu_custom_call.1']
    #allocation6 [shape = 'u8[512]{0}', space=vmem, size = 0x400, scoped, tag = 'input window, operand 1, single buffered']
    #allocation7 [shape = 'u8[512]{0}', space=vmem, size = 0x400, scoped, tag = 'output window, operand 0, single buffered']
    %7 = vsyncpa [#allocation5], 0
    %8 = vsyncpa [#allocation3], 0
    %9 = vsyncpa [#allocation4], 0
    // Predicated region
    $region2: #{tpu_custom_call.1} parent=1 // pred_check
      _
    $region3: #{tpu_custom_call.1} parent=1 // pred_check_branch
      %11 = sbr.rel (0) target = $region5
    $region4: #{tpu_custom_call.1} parent=1 // pred_region
      %13 = vsyncadd [#allocation5], 0
      %s15 = sshll.u32 %s0, 4
      %s16 = int_to_ptr.hbm [resolvable:$true] %s15
      %18 = dma.hbm_to_smem %s16, 16, [#allocation2], [#allocation5]
    $region5: #{tpu_custom_call.1} parent=1 // pred_fallthru
      _
    // Predicated region
    $region6: #{tpu_custom_call.1} parent=1 // pred_check
      _
    $region7: #{tpu_custom_call.1} parent=1 // pred_check_branch
      %20 = sbr.rel (0) target = $region9
    $region8: #{tpu_custom_call.1} parent=1 // pred_region
      %22 = vsyncadd [#allocation3], 0
      %s24 = sshll.u32 %s1, 4
      %s25 = int_to_ptr.hbm [resolvable:$true] %s24
      %s26 = sshll.u32 [#allocation6], 4
      %s27 = int_to_ptr.vmem [resolvable:$true] %s26
      %29 = dma.hbm_to_vmem [thread:$0]  %s25, 16, %s27, [#allocation3]
    $region9: #{tpu_custom_call.1} parent=1 // pred_fallthru
      _
    // Predicated region
    $region10: #{tpu_custom_call.1} parent=1 // pred_check
      _
    $region11: #{tpu_custom_call.1} parent=1 // pred_check_branch
      %31 = sbr.rel (0) target = $region13
    $region12: #{tpu_custom_call.1} parent=1 // pred_region
      %33 = dma.done [#allocation5], 16
    $region13: #{tpu_custom_call.1} parent=1 // pred_fallthru
      _
    // Predicated region
    $region14: #{tpu_custom_call.1} parent=1 // pred_check
      _
    $region15: #{tpu_custom_call.1} parent=1 // pred_check_branch
      %35 = sbr.rel (0) target = $region17
    $region16: #{tpu_custom_call.1} parent=1 // pred_region
      %37 = dma.done [#allocation3], 16
    $region17: #{tpu_custom_call.1} parent=1 // pred_fallthru
      _
    %38 = sfence
    %s39 = sld [smem:[#allocation2]]
    %s40 = sld [smem:[#allocation2 + $0x1]]
    %v41 = vld [vmem:[#allocation6] sm:$0x1]
    %v42 = vstv %s39
    %v43 = vmul.f32 %v41, %v42
    %v44 = vstv %s40
    %v45 = vadd.f32 %v43, %v44
    %46 = vst [vmem:[#allocation7] sm:$0x1] %v45
    // Predicated region
    $region18: #{tpu_custom_call.1} parent=1 // pred_check
      _
    $region19: #{tpu_custom_call.1} parent=1 // pred_check_branch
      %48 = sbr.rel (0) target = $region21
    $region20: #{tpu_custom_call.1} parent=1 // pred_region
      %50 = vsyncadd [#allocation4], 0
      %s52 = sshll.u32 [#allocation7], 4
      %s53 = int_to_ptr.vmem [resolvable:$true] %s52
      %s54 = sshll.u32 %s2, 4
      %s55 = int_to_ptr.hbm [resolvable:$true] %s54
      %57 = dma.vmem_to_hbm [thread:$0]  %s53, 16, %s55, [#allocation4]
    $region21: #{tpu_custom_call.1} parent=1 // pred_fallthru
      _
    // Predicated region
    $region22: #{tpu_custom_call.1} parent=1 // pred_check
      _
    $region23: #{tpu_custom_call.1} parent=1 // pred_check_branch
      %59 = sbr.rel (0) target = $region25
    $region24: #{tpu_custom_call.1} parent=1 // pred_region
      %61 = dma.done [#allocation4], 16
    $region25: #{tpu_custom_call.1} parent=1 // pred_fallthru
      _
    %62 = vsyncpa [#allocation3], 1
    %63 = vsyncpa [#allocation4], 1
    %64 = vsyncpa [#allocation5], 1

</llo_original>
